<compile_context>
chip_gen: v7x
topology: tpu7x:2x2x1
jax: 0.10.0
libtpu: 0.0.40
codegen_flags: <defaults>
</compile_context>

<pallas_src>
import functools

import jax
import jax.numpy as jnp
from jax.experimental import pallas as pl
from jax.experimental.pallas import tpu as pltpu

EPS = 1e-5


def _ln(t, gamma, beta):
    """LayerNorm over the last axis (biased variance, eps inside rsqrt) — matches nn.LayerNorm."""
    mu = jnp.mean(t, axis=-1, keepdims=True)
    var = jnp.mean((t - mu) ** 2, axis=-1, keepdims=True)
    return (t - mu) * jax.lax.rsqrt(var + EPS) * gamma + beta


def pe_kernel(x_ref, w_enc_ref, vec_d_ref, w_lin_ref, vec_hd_ref,
              w_dec_ref, b_dec_ref, o_ref, *, num_heads, model_dim):
    H, D = num_heads, model_dim
    mm_dtype = w_enc_ref.dtype          # f32 or bf16 MXU operands (accumulation is f32)

    x = x_ref[0]                        # (ts, in_dim), f32
    b_enc = vec_d_ref[0:1, :]           # (1, D)
    g1 = vec_d_ref[1:2, :]
    be1 = vec_d_ref[2:3, :]
    b_lin = vec_hd_ref[0:1, :]          # (1, H*D)
    g2_t = vec_hd_ref[1:2, :]           # g2 tiled H times
    be2_t = vec_hd_ref[2:3, :]          # be2 tiled H times

    # ---- p_enc + LayerNorm1 (head-independent: computed exactly once per tile) ----
    t = jnp.dot(x.astype(mm_dtype), w_enc_ref[...],
                preferred_element_type=jnp.float32) + b_enc          # (ts, D)
    t = _ln(t, g1, be1)

    # ---- fused per-head linear: one lane-dense (ts, H*D) matmul ----
    u = jnp.dot(t.astype(mm_dtype), w_lin_ref[...],
                preferred_element_type=jnp.float32) + b_lin          # (ts, H*D)

    # ---- LayerNorm2 per head on the slab (same math as view+permute+LN in torch) ----
    cols = []
    for h in range(H):                                  # static unroll, H is small
        uh = u[:, h * D:(h + 1) * D]                    # (ts, D) static lane slice
        mu = jnp.mean(uh, axis=-1, keepdims=True)
        var = jnp.mean((uh - mu) ** 2, axis=-1, keepdims=True)
        cols.append((uh - mu) * jax.lax.rsqrt(var + EPS))
    n = jnp.concatenate(cols, axis=-1) * g2_t + be2_t                 # (ts, H*D)

    # ---- p_dec for all heads at once via block-diagonal weight (lane-dense output) ----
    out = jnp.dot(n.astype(mm_dtype), w_dec_ref[...],
                  preferred_element_type=jnp.float32) + b_dec_ref[...]  # (ts, HO_pad)
    o_ref[0] = out.astype(o_ref.dtype)


def positional_encoding(x, params, num_heads, model_dim, out_dim,
                        *, matmul_dtype=jnp.float32, seq_tile=None):
    """Forward pass of PositionalEncoding. Returns (B, H, S, out_dim) like the PyTorch module."""
    B, S, in_dim = x.shape
    H, D = num_heads, model_dim
    HD, HO = H * D, H * out_dim
    HO_pad = ((HO + 127) // 128) * 128 if HO > 128 else 128   # lane-dense (unmasked) stores

    (w_enc, b_enc, g1, be1, w_lin, b_lin, g2, be2, w_dec, b_dec) = params

    f32 = jnp.float32
    # Pack the tiny per-feature vectors into two sublane-aligned slabs (fewer DMAs/buffers).
    vec_d = (jnp.zeros((8, D), f32)
             .at[0].set(b_enc).at[1].set(g1).at[2].set(be1))
    vec_hd = (jnp.zeros((8, HD), f32)
              .at[0].set(b_lin)
              .at[1].set(jnp.tile(g2, H))
              .at[2].set(jnp.tile(be2, H)))
    # Block-diagonal p_dec weight: head h's features [h*D:(h+1)*D] -> cols [h*out:(h+1)*out].
    w_dec_blk = jnp.zeros((HD, HO_pad), f32)
    for h in range(H):
        w_dec_blk = w_dec_blk.at[h * D:(h + 1) * D,
                                 h * out_dim:(h + 1) * out_dim].set(w_dec)
    b_dec_t = jnp.zeros((1, HO_pad), f32).at[0, :HO].set(jnp.tile(b_dec, H))

    # Optional bf16 operands for the MXU (v6e/v7x); LayerNorm math stays in f32.
    w_enc_c = w_enc.astype(matmul_dtype)
    w_lin_c = w_lin.astype(matmul_dtype)
    w_dec_c = w_dec_blk.astype(matmul_dtype)

    # Tile S so double-buffered blocks stay well inside VMEM (64 MiB on v7x).
    if seq_tile is None:
        seq_tile = S if S <= 512 else 512
    if S % seq_tile != 0:
        seq_tile = S
    grid = (B, S // seq_tile)

    kernel = functools.partial(pe_kernel, num_heads=H, model_dim=D)

    y = pl.pallas_call(
        kernel,
        out_shape=jax.ShapeDtypeStruct((B, S, HO_pad), jnp.float32),
        grid_spec=pl.GridSpec(
            grid=grid,
            in_specs=[
                pl.BlockSpec((1, seq_tile, in_dim), lambda b, s: (b, s, 0)),  # x
                pl.BlockSpec((in_dim, D),           lambda b, s: (0, 0)),     # W_enc
                pl.BlockSpec((8, D),                lambda b, s: (0, 0)),     # [b_enc, g1, be1]
                pl.BlockSpec((D, HD),               lambda b, s: (0, 0)),     # fused W_lin
                pl.BlockSpec((8, HD),               lambda b, s: (0, 0)),     # [b_lin, g2, be2] (tiled)
                pl.BlockSpec((HD, HO_pad),          lambda b, s: (0, 0)),     # block-diag W_dec
                pl.BlockSpec((1, HO_pad),           lambda b, s: (0, 0)),     # tiled b_dec
            ],
            out_specs=pl.BlockSpec((1, seq_tile, HO_pad), lambda b, s: (b, s, 0)),
        ),
        compiler_params=pltpu.CompilerParams(
            dimension_semantics=("parallel", "parallel")),
    )(x, w_enc_c, vec_d, w_lin_c, vec_hd, w_dec_c, b_dec_t)

    # Lane-dense kernel layout (B, S, HO_pad) -> module layout (B, H, S, out_dim).
    return y[..., :HO].reshape(B, S, H, out_dim).transpose(0, 2, 1, 3)


def make_params(key, in_dim, num_heads, model_dim, out_dim):
    """Deterministic synthetic parameters (shapes per the nn.Module __init__)."""
    H, D = num_heads, model_dim
    ks = jax.random.split(key, 10)
    s = 0.05
    w_enc = s * jax.random.normal(ks[0], (in_dim, D), jnp.float32)
    b_enc = s * jax.random.normal(ks[1], (D,), jnp.float32)
    g1 = 1.0 + 0.1 * jax.random.normal(ks[2], (D,), jnp.float32)
    be1 = 0.1 * jax.random.normal(ks[3], (D,), jnp.float32)
    # self.linear: Linear(model_dim, num_heads*model_dim), stored fused as (D, H*D) = W^T
    w_lin = s * jax.random.normal(ks[4], (D, H * D), jnp.float32)
    b_lin = s * jax.random.normal(ks[5], (H * D,), jnp.float32)
    g2 = 1.0 + 0.1 * jax.random.normal(ks[6], (D,), jnp.float32)
    be2 = 0.1 * jax.random.normal(ks[7], (D,), jnp.float32)
    w_dec = s * jax.random.normal(ks[8], (D, out_dim), jnp.float32)
    b_dec = s * jax.random.normal(ks[9], (out_dim,), jnp.float32)
    return (w_enc, b_enc, g1, be1, w_lin, b_lin, g2, be2, w_dec, b_dec)


def reference(x, params, num_heads, model_dim, out_dim):
    """Pure-JAX reference mirroring the PyTorch forward exactly."""
    (w_enc, b_enc, g1, be1, w_lin, b_lin, g2, be2, w_dec, b_dec) = params
    B, S, _ = x.shape
    H, D = num_heads, model_dim
    t = x @ w_enc + b_enc                               # p_enc
    t = _ln(t, g1, be1)                                 # layerNorm1
    t = t @ w_lin + b_lin                               # linear  -> (B, S, H*D)
    t = t.reshape(B, S, H, D).transpose(0, 2, 1, 3)     # view + permute(0,2,1,3)
    t = _ln(t, g2, be2)                                 # layerNorm2
    return t @ w_dec + b_dec                            # p_dec   -> (B, H, S, out)


if __name__ == "__main__":
    B, S = 2, 8
    in_dim, num_heads, model_dim, out_dim = 16, 4, 32, 8

    key = jax.random.PRNGKey(0)
    kx, kp = jax.random.split(key)
    x = jax.random.normal(kx, (B, S, in_dim), jnp.float32)
    params = make_params(kp, in_dim, num_heads, model_dim, out_dim)

    y_ref = reference(x, params, num_heads, model_dim, out_dim)

    # f32 path (exact semantics of the PyTorch module)
    y = positional_encoding(x, params, num_heads, model_dim, out_dim)
    y = jax.block_until_ready(y)
    assert y.shape == (B, num_heads, S, out_dim)
    assert jnp.allclose(y, y_ref, atol=1e-5, rtol=1e-5), "f32 kernel mismatch vs reference"

    # bf16 MXU-operand fast path (v6e/v7x); f32 accumulation + f32 LayerNorm math.
    y_bf16 = positional_encoding(x, params, num_heads, model_dim, out_dim,
                                 matmul_dtype=jnp.bfloat16)
    y_bf16 = jax.block_until_ready(y_bf16)
    assert jnp.allclose(y_bf16, y_ref, atol=5e-2, rtol=5e-2), "bf16 kernel mismatch vs reference"

    print("KERNEL_OK")
</pallas_src>

<mosaic_0001>
module attributes {stable_mosaic.version = 11 : i64} {
  func.func @pe_kernel(%arg0: i32, %arg1: i32, %arg2: memref<1x8x16xf32, #tpu.memory_space<vmem>>, %arg3: memref<16x32xf32, #tpu.memory_space<vmem>>, %arg4: memref<8x32xf32, #tpu.memory_space<vmem>>, %arg5: memref<32x128xf32, #tpu.memory_space<vmem>>, %arg6: memref<8x128xf32, #tpu.memory_space<vmem>>, %arg7: memref<128x128xf32, #tpu.memory_space<vmem>>, %arg8: memref<1x128xf32, #tpu.memory_space<vmem>>, %arg9: memref<1x8x128xf32, #tpu.memory_space<vmem>>) attributes {dimension_semantics = [#tpu.dimension_semantics<parallel>, #tpu.dimension_semantics<parallel>], iteration_bounds = array<i64: 2, 1>, scalar_prefetch = 0 : i64, scratch_operands = 0 : i64, tpu.core_type = #tpu.core_type<tc>, window_params = [{transform_indices = @transform_0, window_bounds = array<i64: 1, 8, 16>}, {pipeline_mode = #tpu.pipeline_mode<synchronous>, transform_indices = @transform_1, window_bounds = array<i64: 16, 32>}, {pipeline_mode = #tpu.pipeline_mode<synchronous>, transform_indices = @transform_2, window_bounds = array<i64: 8, 32>}, {pipeline_mode = #tpu.pipeline_mode<synchronous>, transform_indices = @transform_3, window_bounds = array<i64: 32, 128>}, {pipeline_mode = #tpu.pipeline_mode<synchronous>, transform_indices = @transform_4, window_bounds = array<i64: 8, 128>}, {pipeline_mode = #tpu.pipeline_mode<synchronous>, transform_indices = @transform_5, window_bounds = array<i64: 128, 128>}, {pipeline_mode = #tpu.pipeline_mode<synchronous>, transform_indices = @transform_6, window_bounds = array<i64: 1, 128>}, {transform_indices = @transform_7, window_bounds = array<i64: 1, 8, 128>}]} {
    %c0 = arith.constant 0 : index
    %c0_0 = arith.constant 0 : index
    %c0_1 = arith.constant 0 : index
    %0 = vector.load %arg2[%c0, %c0_0, %c0_1] : memref<1x8x16xf32, #tpu.memory_space<vmem>>, vector<1x8x16xf32>
    %1 = vector.shape_cast %0 : vector<1x8x16xf32> to vector<8x16xf32>
    %c0_2 = arith.constant 0 : index
    %c0_3 = arith.constant 0 : index
    %2 = vector.load %arg4[%c0_2, %c0_3] : memref<8x32xf32, #tpu.memory_space<vmem>>, vector<1x32xf32>
    %c1 = arith.constant 1 : index
    %c0_4 = arith.constant 0 : index
    %3 = vector.load %arg4[%c1, %c0_4] : memref<8x32xf32, #tpu.memory_space<vmem>>, vector<1x32xf32>
    %c2 = arith.constant 2 : index
    %c0_5 = arith.constant 0 : index
    %4 = vector.load %arg4[%c2, %c0_5] : memref<8x32xf32, #tpu.memory_space<vmem>>, vector<1x32xf32>
    %c0_6 = arith.constant 0 : index
    %c0_7 = arith.constant 0 : index
    %5 = vector.load %arg6[%c0_6, %c0_7] : memref<8x128xf32, #tpu.memory_space<vmem>>, vector<1x128xf32>
    %c1_8 = arith.constant 1 : index
    %c0_9 = arith.constant 0 : index
    %6 = vector.load %arg6[%c1_8, %c0_9] : memref<8x128xf32, #tpu.memory_space<vmem>>, vector<1x128xf32>
    %c2_10 = arith.constant 2 : index
    %c0_11 = arith.constant 0 : index
    %7 = vector.load %arg6[%c2_10, %c0_11] : memref<8x128xf32, #tpu.memory_space<vmem>>, vector<1x128xf32>
    %c0_12 = arith.constant 0 : index
    %c0_13 = arith.constant 0 : index
    %8 = vector.load %arg3[%c0_12, %c0_13] : memref<16x32xf32, #tpu.memory_space<vmem>>, vector<16x32xf32>
    %cst = arith.constant dense<0.000000e+00> : vector<8x32xf32>
    %9 = tpu.matmul %1, %8, %cst {dimension_numbers = #tpu.dot_dimension_numbers<[1], [0], [0], [1], [0, 0, 1, 1], [], []>} : vector<8x16xf32>, vector<16x32xf32>, vector<8x32xf32> -> vector<8x32xf32>
    %10 = vector.broadcast %2 : vector<1x32xf32> to vector<8x32xf32>
    %11 = arith.addf %9, %10 : vector<8x32xf32>
    %cst_14 = arith.constant dense<0.000000e+00> : vector<8xf32>
    %12 = vector.multi_reduction <add>, %11, %cst_14 [1] : vector<8x32xf32> to vector<8xf32>
    %13 = vector.shape_cast %12 : vector<8xf32> to vector<8x1xf32>
    %cst_15 = arith.constant 3.200000e+01 : f32
    %14 = vector.broadcast %cst_15 : f32 to vector<8x1xf32>
    %15 = arith.divf %13, %14 : vector<8x1xf32>
    %16 = vector.broadcast %15 : vector<8x1xf32> to vector<8x32xf32>
    %17 = arith.subf %11, %16 : vector<8x32xf32>
    %18 = arith.mulf %17, %17 : vector<8x32xf32>
    %cst_16 = arith.constant dense<0.000000e+00> : vector<8xf32>
    %19 = vector.multi_reduction <add>, %18, %cst_16 [1] : vector<8x32xf32> to vector<8xf32>
    %20 = vector.shape_cast %19 : vector<8xf32> to vector<8x1xf32>
    %cst_17 = arith.constant 3.200000e+01 : f32
    %21 = vector.broadcast %cst_17 : f32 to vector<8x1xf32>
    %22 = arith.divf %20, %21 : vector<8x1xf32>
    %23 = vector.broadcast %15 : vector<8x1xf32> to vector<8x32xf32>
    %24 = arith.subf %11, %23 : vector<8x32xf32>
    %cst_18 = arith.constant 9.99999974E-6 : f32
    %25 = vector.broadcast %cst_18 : f32 to vector<8x1xf32>
    %26 = arith.addf %22, %25 : vector<8x1xf32>
    %27 = math.rsqrt %26 : vector<8x1xf32>
    %28 = vector.broadcast %27 : vector<8x1xf32> to vector<8x32xf32>
    %29 = arith.mulf %24, %28 : vector<8x32xf32>
    %30 = vector.broadcast %3 : vector<1x32xf32> to vector<8x32xf32>
    %31 = arith.mulf %29, %30 : vector<8x32xf32>
    %32 = vector.broadcast %4 : vector<1x32xf32> to vector<8x32xf32>
    %33 = arith.addf %31, %32 : vector<8x32xf32>
    %c0_19 = arith.constant 0 : index
    %c0_20 = arith.constant 0 : index
    %34 = vector.load %arg5[%c0_19, %c0_20] : memref<32x128xf32, #tpu.memory_space<vmem>>, vector<32x128xf32>
    %cst_21 = arith.constant dense<0.000000e+00> : vector<8x128xf32>
    %35 = tpu.matmul %33, %34, %cst_21 {dimension_numbers = #tpu.dot_dimension_numbers<[1], [0], [0], [1], [0, 0, 1, 1], [], []>} : vector<8x32xf32>, vector<32x128xf32>, vector<8x128xf32> -> vector<8x128xf32>
    %36 = vector.broadcast %5 : vector<1x128xf32> to vector<8x128xf32>
    %37 = arith.addf %35, %36 : vector<8x128xf32>
    %38 = vector.extract_strided_slice %37 {offsets = [0, 0], sizes = [8, 32], strides = [1, 1]} : vector<8x128xf32> to vector<8x32xf32>
    %cst_22 = arith.constant dense<0.000000e+00> : vector<8xf32>
    %39 = vector.multi_reduction <add>, %38, %cst_22 [1] : vector<8x32xf32> to vector<8xf32>
    %40 = vector.shape_cast %39 : vector<8xf32> to vector<8x1xf32>
    %cst_23 = arith.constant 3.200000e+01 : f32
    %41 = vector.broadcast %cst_23 : f32 to vector<8x1xf32>
    %42 = arith.divf %40, %41 : vector<8x1xf32>
    %43 = vector.broadcast %42 : vector<8x1xf32> to vector<8x32xf32>
    %44 = arith.subf %38, %43 : vector<8x32xf32>
    %45 = arith.mulf %44, %44 : vector<8x32xf32>
    %cst_24 = arith.constant dense<0.000000e+00> : vector<8xf32>
    %46 = vector.multi_reduction <add>, %45, %cst_24 [1] : vector<8x32xf32> to vector<8xf32>
    %47 = vector.shape_cast %46 : vector<8xf32> to vector<8x1xf32>
    %cst_25 = arith.constant 3.200000e+01 : f32
    %48 = vector.broadcast %cst_25 : f32 to vector<8x1xf32>
    %49 = arith.divf %47, %48 : vector<8x1xf32>
    %50 = vector.broadcast %42 : vector<8x1xf32> to vector<8x32xf32>
    %51 = arith.subf %38, %50 : vector<8x32xf32>
    %cst_26 = arith.constant 9.99999974E-6 : f32
    %52 = vector.broadcast %cst_26 : f32 to vector<8x1xf32>
    %53 = arith.addf %49, %52 : vector<8x1xf32>
    %54 = math.rsqrt %53 : vector<8x1xf32>
    %55 = vector.broadcast %54 : vector<8x1xf32> to vector<8x32xf32>
    %56 = arith.mulf %51, %55 : vector<8x32xf32>
    %57 = vector.extract_strided_slice %37 {offsets = [0, 32], sizes = [8, 32], strides = [1, 1]} : vector<8x128xf32> to vector<8x32xf32>
    %cst_27 = arith.constant dense<0.000000e+00> : vector<8xf32>
    %58 = vector.multi_reduction <add>, %57, %cst_27 [1] : vector<8x32xf32> to vector<8xf32>
    %59 = vector.shape_cast %58 : vector<8xf32> to vector<8x1xf32>
    %cst_28 = arith.constant 3.200000e+01 : f32
    %60 = vector.broadcast %cst_28 : f32 to vector<8x1xf32>
    %61 = arith.divf %59, %60 : vector<8x1xf32>
    %62 = vector.broadcast %61 : vector<8x1xf32> to vector<8x32xf32>
    %63 = arith.subf %57, %62 : vector<8x32xf32>
    %64 = arith.mulf %63, %63 : vector<8x32xf32>
    %cst_29 = arith.constant dense<0.000000e+00> : vector<8xf32>
    %65 = vector.multi_reduction <add>, %64, %cst_29 [1] : vector<8x32xf32> to vector<8xf32>
    %66 = vector.shape_cast %65 : vector<8xf32> to vector<8x1xf32>
    %cst_30 = arith.constant 3.200000e+01 : f32
    %67 = vector.broadcast %cst_30 : f32 to vector<8x1xf32>
    %68 = arith.divf %66, %67 : vector<8x1xf32>
    %69 = vector.broadcast %61 : vector<8x1xf32> to vector<8x32xf32>
    %70 = arith.subf %57, %69 : vector<8x32xf32>
    %cst_31 = arith.constant 9.99999974E-6 : f32
    %71 = vector.broadcast %cst_31 : f32 to vector<8x1xf32>
    %72 = arith.addf %68, %71 : vector<8x1xf32>
    %73 = math.rsqrt %72 : vector<8x1xf32>
    %74 = vector.broadcast %73 : vector<8x1xf32> to vector<8x32xf32>
    %75 = arith.mulf %70, %74 : vector<8x32xf32>
    %76 = vector.extract_strided_slice %37 {offsets = [0, 64], sizes = [8, 32], strides = [1, 1]} : vector<8x128xf32> to vector<8x32xf32>
    %cst_32 = arith.constant dense<0.000000e+00> : vector<8xf32>
    %77 = vector.multi_reduction <add>, %76, %cst_32 [1] : vector<8x32xf32> to vector<8xf32>
    %78 = vector.shape_cast %77 : vector<8xf32> to vector<8x1xf32>
    %cst_33 = arith.constant 3.200000e+01 : f32
    %79 = vector.broadcast %cst_33 : f32 to vector<8x1xf32>
    %80 = arith.divf %78, %79 : vector<8x1xf32>
    %81 = vector.broadcast %80 : vector<8x1xf32> to vector<8x32xf32>
    %82 = arith.subf %76, %81 : vector<8x32xf32>
    %83 = arith.mulf %82, %82 : vector<8x32xf32>
    %cst_34 = arith.constant dense<0.000000e+00> : vector<8xf32>
    %84 = vector.multi_reduction <add>, %83, %cst_34 [1] : vector<8x32xf32> to vector<8xf32>
    %85 = vector.shape_cast %84 : vector<8xf32> to vector<8x1xf32>
    %cst_35 = arith.constant 3.200000e+01 : f32
    %86 = vector.broadcast %cst_35 : f32 to vector<8x1xf32>
    %87 = arith.divf %85, %86 : vector<8x1xf32>
    %88 = vector.broadcast %80 : vector<8x1xf32> to vector<8x32xf32>
    %89 = arith.subf %76, %88 : vector<8x32xf32>
    %cst_36 = arith.constant 9.99999974E-6 : f32
    %90 = vector.broadcast %cst_36 : f32 to vector<8x1xf32>
    %91 = arith.addf %87, %90 : vector<8x1xf32>
    %92 = math.rsqrt %91 : vector<8x1xf32>
    %93 = vector.broadcast %92 : vector<8x1xf32> to vector<8x32xf32>
    %94 = arith.mulf %89, %93 : vector<8x32xf32>
    %95 = vector.extract_strided_slice %37 {offsets = [0, 96], sizes = [8, 32], strides = [1, 1]} : vector<8x128xf32> to vector<8x32xf32>
    %cst_37 = arith.constant dense<0.000000e+00> : vector<8xf32>
    %96 = vector.multi_reduction <add>, %95, %cst_37 [1] : vector<8x32xf32> to vector<8xf32>
    %97 = vector.shape_cast %96 : vector<8xf32> to vector<8x1xf32>
    %cst_38 = arith.constant 3.200000e+01 : f32
    %98 = vector.broadcast %cst_38 : f32 to vector<8x1xf32>
    %99 = arith.divf %97, %98 : vector<8x1xf32>
    %100 = vector.broadcast %99 : vector<8x1xf32> to vector<8x32xf32>
    %101 = arith.subf %95, %100 : vector<8x32xf32>
    %102 = arith.mulf %101, %101 : vector<8x32xf32>
    %cst_39 = arith.constant dense<0.000000e+00> : vector<8xf32>
    %103 = vector.multi_reduction <add>, %102, %cst_39 [1] : vector<8x32xf32> to vector<8xf32>
    %104 = vector.shape_cast %103 : vector<8xf32> to vector<8x1xf32>
    %cst_40 = arith.constant 3.200000e+01 : f32
    %105 = vector.broadcast %cst_40 : f32 to vector<8x1xf32>
    %106 = arith.divf %104, %105 : vector<8x1xf32>
    %107 = vector.broadcast %99 : vector<8x1xf32> to vector<8x32xf32>
    %108 = arith.subf %95, %107 : vector<8x32xf32>
    %cst_41 = arith.constant 9.99999974E-6 : f32
    %109 = vector.broadcast %cst_41 : f32 to vector<8x1xf32>
    %110 = arith.addf %106, %109 : vector<8x1xf32>
    %111 = math.rsqrt %110 : vector<8x1xf32>
    %112 = vector.broadcast %111 : vector<8x1xf32> to vector<8x32xf32>
    %113 = arith.mulf %108, %112 : vector<8x32xf32>
    %114 = tpu.concatenate %56, %75, %94, %113 in 1 : vector<8x32xf32>, vector<8x32xf32>, vector<8x32xf32>, vector<8x32xf32> -> vector<8x128xf32>
    %115 = vector.broadcast %6 : vector<1x128xf32> to vector<8x128xf32>
    %116 = arith.mulf %114, %115 : vector<8x128xf32>
    %117 = vector.broadcast %7 : vector<1x128xf32> to vector<8x128xf32>
    %118 = arith.addf %116, %117 : vector<8x128xf32>
    %c0_42 = arith.constant 0 : index
    %c0_43 = arith.constant 0 : index
    %119 = vector.load %arg7[%c0_42, %c0_43] : memref<128x128xf32, #tpu.memory_space<vmem>>, vector<128x128xf32>
    %cst_44 = arith.constant dense<0.000000e+00> : vector<8x128xf32>
    %120 = tpu.matmul %118, %119, %cst_44 {dimension_numbers = #tpu.dot_dimension_numbers<[1], [0], [0], [1], [0, 0, 1, 1], [], []>} : vector<8x128xf32>, vector<128x128xf32>, vector<8x128xf32> -> vector<8x128xf32>
    %c0_45 = arith.constant 0 : index
    %c0_46 = arith.constant 0 : index
    %121 = vector.load %arg8[%c0_45, %c0_46] : memref<1x128xf32, #tpu.memory_space<vmem>>, vector<1x128xf32>
    %122 = vector.broadcast %121 : vector<1x128xf32> to vector<8x128xf32>
    %123 = arith.addf %120, %122 : vector<8x128xf32>
    %c0_47 = arith.constant 0 : index
    %c0_48 = arith.constant 0 : index
    %c0_49 = arith.constant 0 : index
    %124 = vector.load %arg9[%c0_47, %c0_48, %c0_49] : memref<1x8x128xf32, #tpu.memory_space<vmem>>, vector<1x8x128xf32>
    %125 = vector.shape_cast %124 : vector<1x8x128xf32> to vector<8x128xf32>
    %126 = vector.shape_cast %123 : vector<8x128xf32> to vector<1x8x128xf32>
    tpu.vector_store %arg9[%c0_47, %c0_48, %c0_49], %126 {strides = array<i32>} : memref<1x8x128xf32, #tpu.memory_space<vmem>>, vector<1x8x128xf32>,
    return
  }
  func.func @transform_0(%arg0: i32, %arg1: i32) -> (i32, i32, i32) {
    %c0_i32 = arith.constant 0 : i32
    %c0_i32_0 = arith.constant 0 : i32
    return %arg0, %arg1, %c0_i32 : i32, i32, i32
  }
  func.func @transform_1(%arg0: i32, %arg1: i32) -> (i32, i32) {
    %c0_i32 = arith.constant 0 : i32
    %c0_i32_0 = arith.constant 0 : i32
    %c0_i32_1 = arith.constant 0 : i32
    return %c0_i32, %c0_i32_0 : i32, i32
  }
  func.func @transform_2(%arg0: i32, %arg1: i32) -> (i32, i32) {
    %c0_i32 = arith.constant 0 : i32
    %c0_i32_0 = arith.constant 0 : i32
    %c0_i32_1 = arith.constant 0 : i32
    return %c0_i32, %c0_i32_0 : i32, i32
  }
  func.func @transform_3(%arg0: i32, %arg1: i32) -> (i32, i32) {
    %c0_i32 = arith.constant 0 : i32
    %c0_i32_0 = arith.constant 0 : i32
    %c0_i32_1 = arith.constant 0 : i32
    return %c0_i32, %c0_i32_0 : i32, i32
  }
  func.func @transform_4(%arg0: i32, %arg1: i32) -> (i32, i32) {
    %c0_i32 = arith.constant 0 : i32
    %c0_i32_0 = arith.constant 0 : i32
    %c0_i32_1 = arith.constant 0 : i32
    return %c0_i32, %c0_i32_0 : i32, i32
  }
  func.func @transform_5(%arg0: i32, %arg1: i32) -> (i32, i32) {
    %c0_i32 = arith.constant 0 : i32
    %c0_i32_0 = arith.constant 0 : i32
    %c0_i32_1 = arith.constant 0 : i32
    return %c0_i32, %c0_i32_0 : i32, i32
  }
  func.func @transform_6(%arg0: i32, %arg1: i32) -> (i32, i32) {
    %c0_i32 = arith.constant 0 : i32
    %c0_i32_0 = arith.constant 0 : i32
    %c0_i32_1 = arith.constant 0 : i32
    return %c0_i32, %c0_i32_0 : i32, i32
  }
  func.func @transform_7(%arg0: i32, %arg1: i32) -> (i32, i32, i32) {
    %c0_i32 = arith.constant 0 : i32
    %c0_i32_0 = arith.constant 0 : i32
    return %arg0, %arg1, %c0_i32 : i32, i32, i32
  }
}

</mosaic_0001>

<llo_original>
// kernel: tpu_custom_call.1
$region0: #{tpu_custom_call.1}
  #allocation0 [shape = 'u32[]', space=smem, size = 0x4, offset = 0x4, fixed_abs, tag = 'smem constant byte address 0x4 - core index']
  #allocation1 [shape = 'u32[144,128]{1,0:T(1,128)}', space=vmem, size = 0x12000, scoped, tag = 'internal scratch']
  %s0 = inlined_call_operand.hbm [shape: f32[2,8,16], index: 0, kind: input, shape index: {}]
  %s1 = inlined_call_operand.hbm [shape: f32[16,32], index: 1, kind: input, shape index: {}]
  %s2 = inlined_call_operand.hbm [shape: f32[8,32], index: 2, kind: input, shape index: {}]
  %s3 = inlined_call_operand.hbm [shape: f32[32,128], index: 3, kind: input, shape index: {}]
  %s4 = inlined_call_operand.vmem [shape: f32[8,128], index: 4, kind: input, shape index: {}]
  %s5 = inlined_call_operand.hbm [shape: f32[128,128], index: 5, kind: input, shape index: {}]
  %s6 = inlined_call_operand.vmem [shape: f32[1,128], index: 6, kind: input, shape index: {}]
  %s7 = inlined_call_operand.hbm [shape: f32[2,8,128], index: 7, kind: output, shape index: {}]
  %s8 = sld [smem:[#allocation0]]
  $region81: #{tpu_custom_call.1} parent=0
    _
  %s10 = ssub.s32 1, %s8
  %s11 = scalar_select 0, %s10, %s8
  $region1: #{tpu_custom_call.1} parent=0
    #allocation2 [shape = 'u8[8192]{0}', space=vmem, size = 0x2000, scoped, tag = 'input window, operand 0']
    #allocation3 [shape = 's32[2]{0}', space=sflag, size = 0x8, scoped, tag = 'scoped memory for tpu_custom_call.1']
    #allocation4 [shape = 's32[2]{0}', space=sflag, size = 0x8, scoped, tag = 'scoped memory for tpu_custom_call.1']
    #allocation5 [shape = 'u8[8192]{0}', space=vmem, size = 0x2000, scoped, tag = 'input window, operand 1, single buffered']
    #allocation6 [shape = 's32[1]{0}', space=sflag, size = 0x4, scoped, tag = 'scoped memory for tpu_custom_call.1']
    #allocation7 [shape = 'u8[4096]{0}', space=vmem, size = 0x1000, scoped, tag = 'input window, operand 2, single buffered']
    #allocation8 [shape = 'u8[16384]{0}', space=vmem, size = 0x4000, scoped, tag = 'input window, operand 3, single buffered']
    #allocation9 [shape = 's32[1]{0}', space=sflag, size = 0x4, scoped, tag = 'scoped memory for tpu_custom_call.1']
    #allocation10 [shape = 'u8[65536]{0}', space=vmem, size = 0x10000, scoped, tag = 'input window, operand 5, single buffered']
    #allocation11 [shape = 'u8[8192]{0}', space=vmem, size = 0x2000, scoped, tag = 'output window, operand 0']
    %12 = vsyncpa [#allocation3], 0
    %s13 = scalar_lea.sflag [#allocation3], 1
    %14 = vsyncpa %s13, 0
    %15 = vsyncpa [#allocation6], 0
    %16 = vsyncpa [#allocation9], 0
    %17 = vsyncpa [#allocation4], 0
    %s18 = scalar_lea.sflag [#allocation4], 1
    %19 = vsyncpa %s18, 0
    loop: start=0, step=1, limit=4
    $region2: #{tpu_custom_call.1} parent=1 // loop_pre_header
      _
    $region3: #{tpu_custom_call.1} parent=1 // loop_header
      %s21 = sphi 0, %s25
      %p22 = scmp.ge.s32.totalorder %s21, 4
      %s28 = sphi 0, %s40
      %s29 = sphi 0, %s36
      %s30 = sphi 0, %s28
      %s31 = sphi 0, %s29
      %s32 = sphi 0, %s30
      %s33 = sphi 0, %s31
      %s45 = sphi 0, %s47
      %s48 = sphi 0, %s45
      %s49 = sphi 0, %s48
      %s65 = sphi 0, %s49
      %s69 = sphi 0, %s69
      %s71 = sphi 0, %s69
      %s72 = sphi 0, %s71
      %s86 = sphi 0, %s72
      %s90 = sphi 0, %s90
      %s92 = sphi 0, %s90
      %s93 = sphi 0, %s92
      %s107 = sphi 0, %s93
      %s111 = sphi 0, %s111
      %s113 = sphi 0, %s111
      %s114 = sphi 0, %s113
      %s128 = sphi 0, %s114
      %s132 = sphi 0, %s132
      %s134 = sphi 0, %s132
      %s135 = sphi 0, %s134
      %s149 = sphi 0, %s135
      %s153 = sphi 0, %s153
      %s155 = sphi 0, %s153
      %s156 = sphi 0, %s155
      %s170 = sphi 0, %s156
      %s174 = sphi 0, %s174
      %s176 = sphi 0, %s174
      %s177 = sphi 0, %s176
      %s191 = sphi 0, %s177
      %s199 = sphi 0, %s201
      %s202 = sphi 0, %s199
      %s203 = sphi 0, %s202
      %s219 = sphi 0, %s203
    $region4: #{tpu_custom_call.1} parent=1 // loop_header_branch
      %24 = sbr.rel (%p22) target = $region8
    $region5: #{tpu_custom_call.1} parent=1 // loop_body
      %s26 = ssub.s32 %s21, 1
      %s27 = ssub.s32 %s21, 2
      %s34 = sadd.s32 1, %s29
      %p35 = scmp.ge.s32.totalorder %s34, 1
      %s36 = scalar_select %p35, 0, %s34
      %s37 = sadd.s32 1, %s28
      %s38 = scalar_select %p35, %s37, %s28
      %p39 = scmp.ge.s32.totalorder %s38, 2
      %s40 = scalar_select %p39, 0, %s38
      %s41 = ssub.s32 %s28, %s40
      %s42 = ssub.s32 %s29, %s36
      %s43 = sor.u32 %s41, %s42
      %p44 = scmp.eq.s32.totalorder %s43, 0
      %s46 = sadd.s32 %s45, 1
      %s47 = scalar_select %p44, %s45, %s46
      %p50 = pneg %p44
      %p51 = scmp.eq.s32.totalorder %s21, 1
      %p52 = por %p50, %p51
      %p53 = scmp.ne.s32.totalorder %s45, %s48
      %p54 = scmp.eq.s32.totalorder %s21, 0
      %p55 = por %p53, %p54
      %p56 = scmp.ne.s32.totalorder %s45, %s48
      %p57 = scmp.eq.s32.totalorder %s26, 1
      %p58 = por %p56, %p57
      %p59 = scmp.ne.s32.totalorder %s48, %s49
      %p60 = scmp.eq.s32.totalorder %s26, 0
      %p61 = por %p59, %p60
      %p62 = scmp.ne.s32.totalorder %s48, %s49
      %p63 = scmp.eq.s32.totalorder %s27, 1
      %p64 = por %p62, %p63
      %p66 = scmp.ne.s32.totalorder %s49, %s65
      %p67 = scmp.eq.s32.totalorder %s27, 0
      %p68 = por %p66, %p67
      %s70 = sadd.s32 %s69, 1
      %p73 = scmp.eq.s32.totalorder %s21, 1
      %p74 = scmp.ne.s32.totalorder %s69, %s71
      %p75 = scmp.eq.s32.totalorder %s21, 0
      %p76 = por %p74, %p75
      %p77 = scmp.ne.s32.totalorder %s69, %s71
      %p78 = scmp.eq.s32.totalorder %s26, 1
      %p79 = por %p77, %p78
      %p80 = scmp.ne.s32.totalorder %s71, %s72
      %p81 = scmp.eq.s32.totalorder %s26, 0
      %p82 = por %p80, %p81
      %p83 = scmp.ne.s32.totalorder %s71, %s72
      %p84 = scmp.eq.s32.totalorder %s27, 1
      %p85 = por %p83, %p84
      %p87 = scmp.ne.s32.totalorder %s72, %s86
      %p88 = scmp.eq.s32.totalorder %s27, 0
      %p89 = por %p87, %p88
      %s91 = sadd.s32 %s90, 1
      %p94 = scmp.eq.s32.totalorder %s21, 1
      %p95 = scmp.ne.s32.totalorder %s90, %s92
      %p96 = scmp.eq.s32.totalorder %s21, 0
      %p97 = por %p95, %p96
      %p98 = scmp.ne.s32.totalorder %s90, %s92
      %p99 = scmp.eq.s32.totalorder %s26, 1
      %p100 = por %p98, %p99
      %p101 = scmp.ne.s32.totalorder %s92, %s93
      %p102 = scmp.eq.s32.totalorder %s26, 0
      %p103 = por %p101, %p102
      %p104 = scmp.ne.s32.totalorder %s92, %s93
      %p105 = scmp.eq.s32.totalorder %s27, 1
      %p106 = por %p104, %p105
      %p108 = scmp.ne.s32.totalorder %s93, %s107
      %p109 = scmp.eq.s32.totalorder %s27, 0
      %p110 = por %p108, %p109
      %s112 = sadd.s32 %s111, 1
      %p115 = scmp.eq.s32.totalorder %s21, 1
      %p116 = scmp.ne.s32.totalorder %s111, %s113
      %p117 = scmp.eq.s32.totalorder %s21, 0
      %p118 = por %p116, %p117
      %p119 = scmp.ne.s32.totalorder %s111, %s113
      %p120 = scmp.eq.s32.totalorder %s26, 1
      %p121 = por %p119, %p120
      %p122 = scmp.ne.s32.totalorder %s113, %s114
      %p123 = scmp.eq.s32.totalorder %s26, 0
      %p124 = por %p122, %p123
      %p125 = scmp.ne.s32.totalorder %s113, %s114
      %p126 = scmp.eq.s32.totalorder %s27, 1
      %p127 = por %p125, %p126
      %p129 = scmp.ne.s32.totalorder %s114, %s128
      %p130 = scmp.eq.s32.totalorder %s27, 0
      %p131 = por %p129, %p130
      %s133 = sadd.s32 %s132, 1
      %p136 = scmp.eq.s32.totalorder %s21, 1
      %p137 = scmp.ne.s32.totalorder %s132, %s134
      %p138 = scmp.eq.s32.totalorder %s21, 0
      %p139 = por %p137, %p138
      %p140 = scmp.ne.s32.totalorder %s132, %s134
      %p141 = scmp.eq.s32.totalorder %s26, 1
      %p142 = por %p140, %p141
      %p143 = scmp.ne.s32.totalorder %s134, %s135
      %p144 = scmp.eq.s32.totalorder %s26, 0
      %p145 = por %p143, %p144
      %p146 = scmp.ne.s32.totalorder %s134, %s135
      %p147 = scmp.eq.s32.totalorder %s27, 1
      %p148 = por %p146, %p147
      %p150 = scmp.ne.s32.totalorder %s135, %s149
      %p151 = scmp.eq.s32.totalorder %s27, 0
      %p152 = por %p150, %p151
      %s154 = sadd.s32 %s153, 1
      %p157 = scmp.eq.s32.totalorder %s21, 1
      %p158 = scmp.ne.s32.totalorder %s153, %s155
      %p159 = scmp.eq.s32.totalorder %s21, 0
      %p160 = por %p158, %p159
      %p161 = scmp.ne.s32.totalorder %s153, %s155
      %p162 = scmp.eq.s32.totalorder %s26, 1
      %p163 = por %p161, %p162
      %p164 = scmp.ne.s32.totalorder %s155, %s156
      %p165 = scmp.eq.s32.totalorder %s26, 0
      %p166 = por %p164, %p165
      %p167 = scmp.ne.s32.totalorder %s155, %s156
      %p168 = scmp.eq.s32.totalorder %s27, 1
      %p169 = por %p167, %p168
      %p171 = scmp.ne.s32.totalorder %s156, %s170
      %p172 = scmp.eq.s32.totalorder %s27, 0
      %p173 = por %p171, %p172
      %s175 = sadd.s32 %s174, 1
      %p178 = scmp.eq.s32.totalorder %s21, 1
      %p179 = scmp.ne.s32.totalorder %s174, %s176
      %p180 = scmp.eq.s32.totalorder %s21, 0
      %p181 = por %p179, %p180
      %p182 = scmp.ne.s32.totalorder %s174, %s176
      %p183 = scmp.eq.s32.totalorder %s26, 1
      %p184 = por %p182, %p183
      %p185 = scmp.ne.s32.totalorder %s176, %s177
      %p186 = scmp.eq.s32.totalorder %s26, 0
      %p187 = por %p185, %p186
      %p188 = scmp.ne.s32.totalorder %s176, %s177
      %p189 = scmp.eq.s32.totalorder %s27, 1
      %p190 = por %p188, %p189
      %p192 = scmp.ne.s32.totalorder %s177, %s191
      %p193 = scmp.eq.s32.totalorder %s27, 0
      %p194 = por %p192, %p193
      %s195 = ssub.s32 %s28, %s40
      %s196 = ssub.s32 %s29, %s36
      %s197 = sor.u32 %s195, %s196
      %p198 = scmp.eq.s32.totalorder %s197, 0
      %s200 = sadd.s32 %s199, 1
      %s201 = scalar_select %p198, %s199, %s200
      %p204 = pneg %p198
      %p205 = scmp.eq.s32.totalorder %s21, 1
      %p206 = por %p204, %p205
      %p207 = scmp.ne.s32.totalorder %s199, %s202
      %p208 = scmp.eq.s32.totalorder %s21, 0
      %p209 = por %p207, %p208
      %p210 = scmp.ne.s32.totalorder %s199, %s202
      %p211 = scmp.eq.s32.totalorder %s26, 1
      %p212 = por %p210, %p211
      %p213 = scmp.ne.s32.totalorder %s202, %s203
      %p214 = scmp.eq.s32.totalorder %s26, 0
      %p215 = por %p213, %p214
      %p216 = scmp.ne.s32.totalorder %s202, %s203
      %p217 = scmp.eq.s32.totalorder %s27, 1
      %p218 = por %p216, %p217
      %p220 = scmp.ne.s32.totalorder %s203, %s219
      %p221 = scmp.eq.s32.totalorder %s27, 0
      %p222 = por %p220, %p221
      %p223 = scmp.le.s32.totalorder 1, %s21
      %p224 = scmp.lt.s32.totalorder %s21, 3
      %p225 = pnand %p223, %p224
      %p226 = pneg %p225
      // Predicated region
      $region9: #{tpu_custom_call.1} parent=5 // pred_check
        _
      $region10: #{tpu_custom_call.1} parent=5 // pred_check_branch
        %228 = sbr.rel (%p225) target = $region12
      $region11: #{tpu_custom_call.1} parent=5 // pred_region
        %s229 = ssub.s32 %s21, 1
        // Predicated region
        $region13: #{tpu_custom_call.1} parent=11 // pred_check
          %p230 = pneg %p82
        $region14: #{tpu_custom_call.1} parent=11 // pred_check_branch
          %232 = sbr.rel (%p230) target = $region16
        $region15: #{tpu_custom_call.1} parent=11 // pred_region
          %s234 = ssub.s32 256, 256
          %235 = vsyncadd [#allocation6], %s234
          %s236 = sshll.u32 [#allocation5], 4
          %s237 = int_to_ptr.vmem [resolvable:$true] %s236
          %242 = dma.hbm_to_vmem [thread:$0]  %s1, 256, %s237, [#allocation6], 128, 128, 8
        $region16: #{tpu_custom_call.1} parent=11 // pred_fallthru
          _
        // Predicated region
        $region17: #{tpu_custom_call.1} parent=11 // pred_check
          %p243 = pneg %p103
        $region18: #{tpu_custom_call.1} parent=11 // pred_check_branch
          %245 = sbr.rel (%p243) target = $region20
        $region19: #{tpu_custom_call.1} parent=11 // pred_region
          %s247 = ssub.s32 128, 128
          %248 = vsyncadd [#allocation6], %s247
          %s250 = sshll.u32 [#allocation7], 4
          %s251 = int_to_ptr.vmem [resolvable:$true] %s250
          %253 = dma.hbm_to_vmem [thread:$0]  %s2, 128, %s251, [#allocation6]
        $region20: #{tpu_custom_call.1} parent=11 // pred_fallthru
          _
        // Predicated region
        $region21: #{tpu_custom_call.1} parent=11 // pred_check
          %p254 = pneg %p124
        $region22: #{tpu_custom_call.1} parent=11 // pred_check_branch
          %256 = sbr.rel (%p254) target = $region24
        $region23: #{tpu_custom_call.1} parent=11 // pred_region
          %s258 = ssub.s32 512, 512
          %259 = vsyncadd [#allocation9], %s258
          %s260 = sshll.u32 [#allocation8], 4
          %s261 = int_to_ptr.vmem [resolvable:$true] %s260
          %266 = dma.hbm_to_vmem [thread:$0]  %s3, 512, %s261, [#allocation9], 128, 128, 8
        $region24: #{tpu_custom_call.1} parent=11 // pred_fallthru
          _
        // Predicated region
        $region25: #{tpu_custom_call.1} parent=11 // pred_check
          %p267 = pneg %p145
        $region26: #{tpu_custom_call.1} parent=11 // pred_check_branch
          %269 = sbr.rel (%p267) target = $region28
        $region27: #{tpu_custom_call.1} parent=11 // pred_region
          _
        $region28: #{tpu_custom_call.1} parent=11 // pred_fallthru
          _
        // Predicated region
        $region29: #{tpu_custom_call.1} parent=11 // pred_check
          %p270 = pneg %p166
        $region30: #{tpu_custom_call.1} parent=11 // pred_check_branch
          %272 = sbr.rel (%p270) target = $region32
        $region31: #{tpu_custom_call.1} parent=11 // pred_region
          %s274 = ssub.s32 2048, 2048
          %275 = vsyncadd [#allocation9], %s274
          %s276 = sshll.u32 [#allocation10], 4
          %s277 = int_to_ptr.vmem [resolvable:$true] %s276
          %282 = dma.hbm_to_vmem [thread:$0]  %s5, 2048, %s277, [#allocation9], 128, 128, 8
        $region32: #{tpu_custom_call.1} parent=11 // pred_fallthru
          _
        // Predicated region
        $region33: #{tpu_custom_call.1} parent=11 // pred_check
          %p283 = pneg %p187
        $region34: #{tpu_custom_call.1} parent=11 // pred_check_branch
          %285 = sbr.rel (%p283) target = $region36
        $region35: #{tpu_custom_call.1} parent=11 // pred_region
          _
        $region36: #{tpu_custom_call.1} parent=11 // pred_fallthru
          _
      $region12: #{tpu_custom_call.1} parent=5 // pred_fallthru
        _
      %p286 = scmp.lt.s32.totalorder %s21, 2
      // Predicated region
      $region37: #{tpu_custom_call.1} parent=5 // pred_check
        %p287 = pneg %p286
      $region38: #{tpu_custom_call.1} parent=5 // pred_check_branch
        %289 = sbr.rel (%p287) target = $region40
      $region39: #{tpu_custom_call.1} parent=5 // pred_region
        // Predicated region
        $region41: #{tpu_custom_call.1} parent=39 // pred_check
          %p290 = pneg %p55
        $region42: #{tpu_custom_call.1} parent=39 // pred_check_branch
          %292 = sbr.rel (%p290) target = $region44
        $region43: #{tpu_custom_call.1} parent=39 // pred_region
          %s293 = sand.u32 %s45, 1
          %s294 = scalar_lea.sflag [#allocation3], %s293
          %s295 = sand.u32 %s45, 1
          %s296 = smul.addr %s295, 8
          %s297 = scalar_lea.vmem [#allocation2], %s296
          %s299 = ssub.s32 128, 128
          %300 = vsyncadd %s294, %s299
          %s301 = sadd.s32 %s29, %s28
          %s302 = smul.addr %s301, 128
          %s303 = scalar_lea.hbm %s0, %s302
          %s305 = sshll.u32 %s297, 4
          %s306 = int_to_ptr.vmem [resolvable:$true] %s305
          %308 = dma.hbm_to_vmem [thread:$0]  %s303, 128, %s306, %s294
        $region44: #{tpu_custom_call.1} parent=39 // pred_fallthru
          _
      $region40: #{tpu_custom_call.1} parent=5 // pred_fallthru
        _
      %p309 = scmp.le.s32.totalorder 1, %s21
      %p310 = scmp.lt.s32.totalorder %s21, 3
      %p311 = pnand %p309, %p310
      %p312 = pneg %p311
      // Predicated region
      $region45: #{tpu_custom_call.1} parent=5 // pred_check
        _
      $region46: #{tpu_custom_call.1} parent=5 // pred_check_branch
        %314 = sbr.rel (%p311) target = $region48
      $region47: #{tpu_custom_call.1} parent=5 // pred_region
        %s315 = ssub.s32 %s21, 1
        %s316 = sand.u32 %s48, 1
        %s317 = scalar_lea.sflag [#allocation3], %s316
        %s318 = sand.u32 %s48, 1
        %s319 = smul.addr %s318, 8
        %s320 = scalar_lea.vmem [#allocation2], %s319
        // Predicated region
        $region49: #{tpu_custom_call.1} parent=47 // pred_check
          %p321 = pneg %p61
        $region50: #{tpu_custom_call.1} parent=47 // pred_check_branch
          %323 = sbr.rel (%p321) target = $region52
        $region51: #{tpu_custom_call.1} parent=47 // pred_region
          %324 = dma.done %s317, 128
        $region52: #{tpu_custom_call.1} parent=47 // pred_fallthru
          _
        // Predicated region
        $region53: #{tpu_custom_call.1} parent=47 // pred_check
          %p325 = pneg %p82
        $region54: #{tpu_custom_call.1} parent=47 // pred_check_branch
          %327 = sbr.rel (%p325) target = $region56
        $region55: #{tpu_custom_call.1} parent=47 // pred_region
          %328 = dma.done [#allocation6], 256
        $region56: #{tpu_custom_call.1} parent=47 // pred_fallthru
          _
        // Predicated region
        $region57: #{tpu_custom_call.1} parent=47 // pred_check
          %p329 = pneg %p103
        $region58: #{tpu_custom_call.1} parent=47 // pred_check_branch
          %331 = sbr.rel (%p329) target = $region60
        $region59: #{tpu_custom_call.1} parent=47 // pred_region
          %332 = dma.done [#allocation6], 128
        $region60: #{tpu_custom_call.1} parent=47 // pred_fallthru
          _
        // Predicated region
        $region61: #{tpu_custom_call.1} parent=47 // pred_check
          %p333 = pneg %p124
        $region62: #{tpu_custom_call.1} parent=47 // pred_check_branch
          %335 = sbr.rel (%p333) target = $region64
        $region63: #{tpu_custom_call.1} parent=47 // pred_region
          %336 = dma.done [#allocation9], 512
        $region64: #{tpu_custom_call.1} parent=47 // pred_fallthru
          _
        // Predicated region
        $region65: #{tpu_custom_call.1} parent=47 // pred_check
          %p337 = pneg %p166
        $region66: #{tpu_custom_call.1} parent=47 // pred_check_branch
          %339 = sbr.rel (%p337) target = $region68
        $region67: #{tpu_custom_call.1} parent=47 // pred_region
          %340 = dma.done [#allocation9], 2048
        $region68: #{tpu_custom_call.1} parent=47 // pred_fallthru
          _
        %s341 = sand.u32 %s48, 1
        %s342 = scalar_lea.sflag [#allocation3], %s341
        %s343 = sand.u32 %s48, 1
        %s344 = smul.addr %s343, 8
        %s345 = scalar_lea.vmem [#allocation2], %s344
        %p346 = pneg %p61
        %p347 = pneg %p58
        %p348 = pneg %p82
        %p349 = pneg %p79
        %p350 = pneg %p103
        %p351 = pneg %p100
        %p352 = pneg %p124
        %p353 = pneg %p121
        %p354 = pneg %p145
        %p355 = pneg %p142
        %p356 = pneg %p166
        %p357 = pneg %p163
        %p358 = pneg %p187
        %p359 = pneg %p184
        %p360 = pneg %p215
        %p361 = pneg %p212
        %s362 = sand.u32 %s202, 1
        %s363 = scalar_lea.sflag [#allocation4], %s362
        %s364 = sand.u32 %s202, 1
        %s365 = smul.addr %s364, 8
        %s366 = scalar_lea.vmem [#allocation11], %s365
        %v367 = vld [vmem:[%s320] sm:$0xff]
        %v368 = vld [vmem:[#allocation7] sm:$0x1]
        %v369 = vld [vmem:[#allocation7 + $0x1] sm:$0x1]
        %v370 = vld [vmem:[#allocation7 + $0x2] sm:$0x1]
        %v371 = vld [vmem:[%s4] sm:$0x1]
        %v372 = vld [vmem:[%s4 + $0x1] sm:$0x1]
        %v373 = vld [vmem:[%s4 + $0x2] sm:$0x1]
        %v374 = vld [vmem:[#allocation5] sm:$0xff]
        %v375 = vld [vmem:[#allocation5 + $0x8] sm:$0xff]
        %v376 = vlaneseq
        %v377 = vshrl.u32 %v376, 7
        %v378 = vsub.s32 0, %v377
        %v379 = vrot.slane %v368, %v378
        %vm380 = vcmask 130048
        %v382 = vsel %vm380, %v367, 0
        %384 = vmatprep.subr.mxu0 0.0
        %385 = vmatpush1.msra.mxu0 %v374
        %386 = vmatprep.subr.mxu0 0.0
        %387 = vmatpush1.msra.mxu0 %v375
        %388 = vmatprep.subr.mxu0 0.0
        %389 = vmatpush1.msra.mxu0 0.0
        %390 = vmatprep.subr.mxu0 0.0
        %391 = vmatpush1.msra.mxu0 0.0
        %392 = vmatprep.subr.mxu0 0.0
        %393 = vmatpush1.msra.mxu0 0.0
        %394 = vmatprep.subr.mxu0 0.0
        %395 = vmatpush1.msra.mxu0 0.0
        %396 = vmatprep.subr.mxu0 0.0
        %397 = vmatpush1.msra.mxu0 0.0
        %398 = vmatprep.subr.mxu0 0.0
        %399 = vmatpush1.msra.mxu0 0.0
        %400 = vmatprep.subr.mxu0 0.0
        %401 = vmatpush1.msra.mxu0 0.0
        %402 = vmatprep.subr.mxu0 0.0
        %403 = vmatpush1.msra.mxu0 0.0
        %404 = vmatprep.subr.mxu0 0.0
        %405 = vmatpush1.msra.mxu0 0.0
        %406 = vmatprep.subr.mxu0 0.0
        %407 = vmatpush1.msra.mxu0 0.0
        %408 = vmatprep.subr.mxu0 0.0
        %409 = vmatpush1.msra.mxu0 0.0
        %410 = vmatprep.subr.mxu0 0.0
        %411 = vmatpush1.msra.mxu0 0.0
        %412 = vmatprep.subr.mxu0 0.0
        %413 = vmatpush1.msra.mxu0 0.0
        %414 = vmatprep.subr.mxu0 0.0
        %415 = vmatpush1.msra.mxu0 0.0
        %416 = vmatprep.subr.mxu0 0.0
        %417 = vmatpush1.msra.mxu0 0.0
        %418 = vmatprep.subr.mxu0 0.0
        %419 = vmatpush1.msra.mxu0 0.0
        %420 = vmatprep.subr.mxu0 0.0
        %421 = vmatpush1.msra.mxu0 0.0
        %422 = vmatprep.subr.mxu0 0.0
        %423 = vmatpush1.msra.mxu0 0.0
        %424 = vmatprep.subr.mxu0 0.0
        %425 = vmatpush1.msra.mxu0 0.0
        %426 = vmatprep.subr.mxu0 0.0
        %427 = vmatpush1.msra.mxu0 0.0
        %428 = vmatprep.subr.mxu0 0.0
        %429 = vmatpush1.msra.mxu0 0.0
        %430 = vmatprep.subr.mxu0 0.0
        %431 = vmatpush1.msra.mxu0 0.0
        %432 = vmatprep.subr.mxu0 0.0
        %433 = vmatpush1.msra.mxu0 0.0
        %434 = vmatprep.subr.mxu0 0.0
        %435 = vmatpush1.msra.mxu0 0.0
        %436 = vmatprep.subr.mxu0 0.0
        %437 = vmatpush1.msra.mxu0 0.0
        %438 = vmatprep.subr.mxu0 0.0
        %439 = vmatpush1.msra.mxu0 0.0
        %440 = vmatprep.subr.mxu0 0.0
        %441 = vmatpush1.msra.mxu0 0.0
        %442 = vmatprep.subr.mxu0 0.0
        %443 = vmatpush1.msra.mxu0 0.0
        %444 = vmatprep.subr.mxu0 0.0
        %445 = vmatpush1.msra.mxu0 0.0
        %446 = vmatprep.subr.mxu0 0.0
        %447 = vmatpush1.msra.mxu0 0.0
        %448 = vmatprep.mubr.f32.mxu0 0.0
        %449 = vmatmul.mubr.f32.gmra.mrb[0].mxu0 %v382
        %v450 = vpop.f32.mrb[0].mxu0
        %v451 = vadd.f32 %v379, %v450
        %v452 = vpop.f32.mrb[0].mxu0
        %453 = vdwg.mxu0
        %vm454 = vcmask 261120
        %v455 = vsel %vm454, %v451, 0.0
        %456 = vadd.xlane.f32.xlu0 %v455
        %v457 = vpop.xlane.xlu0 %456
        %v458 = vrcp.pop 32.0
        %v459 = vmul.f32 %v457, %v458
        %v460 = vsub.f32 %v451, %v459
        %v461 = vmul.f32 %v460, %v460
        %v462 = vsel %vm454, %v461, 0.0
        %463 = vadd.xlane.f32.xlu0 %v462
        %v464 = vpop.xlane.xlu0 %463
        %v465 = vmul.f32 %v464, %v458
        %v466 = vadd.f32 %v465, 1e-05
        %v467 = vrsqrt.pop %v466
        %v468 = vmul.f32 %v460, %v467
        %v469 = vlaneseq
        %v470 = vshrl.u32 %v469, 7
        %v471 = vsub.s32 0, %v470
        %v472 = vrot.slane %v369, %v471
        %v473 = vmul.f32 %v468, %v472
        %v474 = vlaneseq
        %v475 = vshrl.u32 %v474, 7
        %v476 = vsub.s32 0, %v475
        %v477 = vrot.slane %v370, %v476
        %v478 = vadd.f32 %v473, %v477
        %v479 = vld [vmem:[#allocation8] sm:$0xff]
        %v480 = vld [vmem:[#allocation8 + $0x8] sm:$0xff]
        %v481 = vld [vmem:[#allocation8 + $0x10] sm:$0xff]
        %v482 = vld [vmem:[#allocation8 + $0x18] sm:$0xff]
        %v483 = vlaneseq
        %v484 = vshrl.u32 %v483, 7
        %v485 = vsub.s32 0, %v484
        %v486 = vrot.slane %v371, %v485
        %v488 = vsel %vm454, %v478, 0
        %490 = vmatprep.subr.mxu0 0.0
        %491 = vmatpush1.msra.mxu0 %v479
        %492 = vmatprep.subr.mxu0 0.0
        %493 = vmatpush1.msra.mxu0 %v480
        %494 = vmatprep.subr.mxu0 0.0
        %495 = vmatpush1.msra.mxu0 %v481
        %496 = vmatprep.subr.mxu0 0.0
        %497 = vmatpush1.msra.mxu0 %v482
        %498 = vmatprep.subr.mxu0 0.0
        %499 = vmatpush1.msra.mxu0 0.0
        %500 = vmatprep.subr.mxu0 0.0
        %501 = vmatpush1.msra.mxu0 0.0
        %502 = vmatprep.subr.mxu0 0.0
        %503 = vmatpush1.msra.mxu0 0.0
        %504 = vmatprep.subr.mxu0 0.0
        %505 = vmatpush1.msra.mxu0 0.0
        %506 = vmatprep.subr.mxu0 0.0
        %507 = vmatpush1.msra.mxu0 0.0
        %508 = vmatprep.subr.mxu0 0.0
        %509 = vmatpush1.msra.mxu0 0.0
        %510 = vmatprep.subr.mxu0 0.0
        %511 = vmatpush1.msra.mxu0 0.0
        %512 = vmatprep.subr.mxu0 0.0
        %513 = vmatpush1.msra.mxu0 0.0
        %514 = vmatprep.subr.mxu0 0.0
        %515 = vmatpush1.msra.mxu0 0.0
        %516 = vmatprep.subr.mxu0 0.0
        %517 = vmatpush1.msra.mxu0 0.0
        %518 = vmatprep.subr.mxu0 0.0
        %519 = vmatpush1.msra.mxu0 0.0
        %520 = vmatprep.subr.mxu0 0.0
        %521 = vmatpush1.msra.mxu0 0.0
        %522 = vmatprep.subr.mxu0 0.0
        %523 = vmatpush1.msra.mxu0 0.0
        %524 = vmatprep.subr.mxu0 0.0
        %525 = vmatpush1.msra.mxu0 0.0
        %526 = vmatprep.subr.mxu0 0.0
        %527 = vmatpush1.msra.mxu0 0.0
        %528 = vmatprep.subr.mxu0 0.0
        %529 = vmatpush1.msra.mxu0 0.0
        %530 = vmatprep.subr.mxu0 0.0
        %531 = vmatpush1.msra.mxu0 0.0
        %532 = vmatprep.subr.mxu0 0.0
        %533 = vmatpush1.msra.mxu0 0.0
        %534 = vmatprep.subr.mxu0 0.0
        %535 = vmatpush1.msra.mxu0 0.0
        %536 = vmatprep.subr.mxu0 0.0
        %537 = vmatpush1.msra.mxu0 0.0
        %538 = vmatprep.subr.mxu0 0.0
        %539 = vmatpush1.msra.mxu0 0.0
        %540 = vmatprep.subr.mxu0 0.0
        %541 = vmatpush1.msra.mxu0 0.0
        %542 = vmatprep.subr.mxu0 0.0
        %543 = vmatpush1.msra.mxu0 0.0
        %544 = vmatprep.subr.mxu0 0.0
        %545 = vmatpush1.msra.mxu0 0.0
        %546 = vmatprep.subr.mxu0 0.0
        %547 = vmatpush1.msra.mxu0 0.0
        %548 = vmatprep.subr.mxu0 0.0
        %549 = vmatpush1.msra.mxu0 0.0
        %550 = vmatprep.subr.mxu0 0.0
        %551 = vmatpush1.msra.mxu0 0.0
        %552 = vmatprep.subr.mxu0 0.0
        %553 = vmatpush1.msra.mxu0 0.0
        %554 = vmatprep.mubr.f32.mxu0 0.0
        %555 = vmatmul.mubr.f32.gmra.mrb[0].mxu0 %v488
        %v556 = vpop.f32.mrb[0].mxu0
        %v557 = vadd.f32 %v486, %v556
        %v558 = vpop.f32.mrb[0].mxu0
        %559 = vdwg.mxu0
        %v560 = vsel %vm454, %v557, 0.0
        %561 = vadd.xlane.f32.xlu0 %v560
        %v562 = vpop.xlane.xlu0 %561
        %v563 = vmul.f32 %v562, %v458
        %v564 = vsub.f32 %v557, %v563
        %v565 = vmul.f32 %v564, %v564
        %v566 = vsel %vm454, %v565, 0.0
        %567 = vadd.xlane.f32.xlu0 %v566
        %v568 = vpop.xlane.xlu0 %567
        %v569 = vmul.f32 %v568, %v458
        %v570 = vadd.f32 %v569, 1e-05
        %v571 = vrsqrt.pop %v570
        %v572 = vmul.f32 %v564, %v571
        %574 = vrot.lane.b32.xlu0 %v557, 96
        %v575 = vpop.permute.xlu0 %574
        %v577 = vsel %vm454, %v575, 0.0
        %578 = vadd.xlane.f32.xlu0 %v577
        %v579 = vpop.xlane.xlu0 %578
        %v580 = vmul.f32 %v579, %v458
        %v581 = vsub.f32 %v557, %v580
        %v582 = vmul.f32 %v581, %v581
        %584 = vrot.lane.b32.xlu0 %v582, 96
        %v585 = vpop.permute.xlu0 %584
        %v587 = vsel %vm454, %v585, 0.0
        %588 = vadd.xlane.f32.xlu0 %v587
        %v589 = vpop.xlane.xlu0 %588
        %v590 = vmul.f32 %v589, %v458
        %v591 = vadd.f32 %v590, 1e-05
        %v592 = vrsqrt.pop %v591
        %v593 = vmul.f32 %v581, %v592
        %594 = vrot.lane.b32.xlu0 %v557, 64
        %v595 = vpop.permute.xlu0 %594
        %v597 = vsel %vm454, %v595, 0.0
        %598 = vadd.xlane.f32.xlu0 %v597
        %v599 = vpop.xlane.xlu0 %598
        %v600 = vmul.f32 %v599, %v458
        %v601 = vsub.f32 %v557, %v600
        %v602 = vmul.f32 %v601, %v601
        %604 = vrot.lane.b32.xlu0 %v602, 64
        %v605 = vpop.permute.xlu0 %604
        %v607 = vsel %vm454, %v605, 0.0
        %608 = vadd.xlane.f32.xlu0 %v607
        %v609 = vpop.xlane.xlu0 %608
        %v610 = vmul.f32 %v609, %v458
        %v611 = vadd.f32 %v610, 1e-05
        %v612 = vrsqrt.pop %v611
        %v613 = vmul.f32 %v601, %v612
        %614 = vrot.lane.b32.xlu0 %v557, 32
        %v615 = vpop.permute.xlu0 %614
        %v617 = vsel %vm454, %v615, 0.0
        %618 = vadd.xlane.f32.xlu0 %v617
        %v619 = vpop.xlane.xlu0 %618
        %v620 = vmul.f32 %v619, %v458
        %v621 = vsub.f32 %v557, %v620
        %v622 = vmul.f32 %v621, %v621
        %624 = vrot.lane.b32.xlu0 %v622, 32
        %v625 = vpop.permute.xlu0 %624
        %v627 = vsel %vm454, %v625, 0.0
        %628 = vadd.xlane.f32.xlu0 %v627
        %v629 = vpop.xlane.xlu0 %628
        %v630 = vmul.f32 %v629, %v458
        %v631 = vadd.f32 %v630, 1e-05
        %v632 = vrsqrt.pop %v631
        %v633 = vmul.f32 %v621, %v632
        %v634 = vsel %vm454, %v572, %v593
        %vm635 = vcmask 523264
        %v636 = vsel %vm635, %v634, %v613
        %vm637 = vcmask 785408
        %v638 = vsel %vm637, %v636, %v633
        %v639 = vlaneseq
        %v640 = vshrl.u32 %v639, 7
        %v641 = vsub.s32 0, %v640
        %v642 = vrot.slane %v372, %v641
        %v643 = vmul.f32 %v638, %v642
        %v644 = vlaneseq
        %v645 = vshrl.u32 %v644, 7
        %v646 = vsub.s32 0, %v645
        %v647 = vrot.slane %v373, %v646
        %v648 = vadd.f32 %v643, %v647
        %v649 = vld [vmem:[#allocation10] sm:$0xff]
        %v650 = vld [vmem:[#allocation10 + $0x8] sm:$0xff]
        %v651 = vld [vmem:[#allocation10 + $0x10] sm:$0xff]
        %v652 = vld [vmem:[#allocation10 + $0x18] sm:$0xff]
        %v653 = vld [vmem:[#allocation10 + $0x20] sm:$0xff]
        %v654 = vld [vmem:[#allocation10 + $0x28] sm:$0xff]
        %v655 = vld [vmem:[#allocation10 + $0x30] sm:$0xff]
        %v656 = vld [vmem:[#allocation10 + $0x38] sm:$0xff]
        %v657 = vld [vmem:[#allocation10 + $0x40] sm:$0xff]
        %v658 = vld [vmem:[#allocation10 + $0x48] sm:$0xff]
        %v659 = vld [vmem:[#allocation10 + $0x50] sm:$0xff]
        %v660 = vld [vmem:[#allocation10 + $0x58] sm:$0xff]
        %v661 = vld [vmem:[#allocation10 + $0x60] sm:$0xff]
        %v662 = vld [vmem:[#allocation10 + $0x68] sm:$0xff]
        %v663 = vld [vmem:[#allocation10 + $0x70] sm:$0xff]
        %v664 = vld [vmem:[#allocation10 + $0x78] sm:$0xff]
        %v665 = vld [vmem:[%s6] sm:$0x1]
        %v667 = vlaneseq
        %v668 = vshrl.u32 %v667, 7
        %v669 = vsub.s32 0, %v668
        %v670 = vrot.slane %v665, %v669
        %672 = vmatprep.subr.mxu0 0.0
        %673 = vmatpush1.msra.mxu0 %v649
        %674 = vmatprep.subr.mxu0 0.0
        %675 = vmatpush1.msra.mxu0 %v650
        %676 = vmatprep.subr.mxu0 0.0
        %677 = vmatpush1.msra.mxu0 %v651
        %678 = vmatprep.subr.mxu0 0.0
        %679 = vmatpush1.msra.mxu0 %v652
        %680 = vmatprep.subr.mxu0 0.0
        %681 = vmatpush1.msra.mxu0 %v653
        %682 = vmatprep.subr.mxu0 0.0
        %683 = vmatpush1.msra.mxu0 %v654
        %684 = vmatprep.subr.mxu0 0.0
        %685 = vmatpush1.msra.mxu0 %v655
        %686 = vmatprep.subr.mxu0 0.0
        %687 = vmatpush1.msra.mxu0 %v656
        %688 = vmatprep.subr.mxu0 0.0
        %689 = vmatpush1.msra.mxu0 %v657
        %690 = vmatprep.subr.mxu0 0.0
        %691 = vmatpush1.msra.mxu0 %v658
        %692 = vmatprep.subr.mxu0 0.0
        %693 = vmatpush1.msra.mxu0 %v659
        %694 = vmatprep.subr.mxu0 0.0
        %695 = vmatpush1.msra.mxu0 %v660
        %696 = vmatprep.subr.mxu0 0.0
        %697 = vmatpush1.msra.mxu0 %v661
        %698 = vmatprep.subr.mxu0 0.0
        %699 = vmatpush1.msra.mxu0 %v662
        %700 = vmatprep.subr.mxu0 0.0
        %701 = vmatpush1.msra.mxu0 %v663
        %702 = vmatprep.subr.mxu0 0.0
        %703 = vmatpush1.msra.mxu0 %v664
        %704 = vmatprep.subr.mxu0 0.0
        %705 = vmatpush1.msra.mxu0 0.0
        %706 = vmatprep.subr.mxu0 0.0
        %707 = vmatpush1.msra.mxu0 0.0
        %708 = vmatprep.subr.mxu0 0.0
        %709 = vmatpush1.msra.mxu0 0.0
        %710 = vmatprep.subr.mxu0 0.0
        %711 = vmatpush1.msra.mxu0 0.0
        %712 = vmatprep.subr.mxu0 0.0
        %713 = vmatpush1.msra.mxu0 0.0
        %714 = vmatprep.subr.mxu0 0.0
        %715 = vmatpush1.msra.mxu0 0.0
        %716 = vmatprep.subr.mxu0 0.0
        %717 = vmatpush1.msra.mxu0 0.0
        %718 = vmatprep.subr.mxu0 0.0
        %719 = vmatpush1.msra.mxu0 0.0
        %720 = vmatprep.subr.mxu0 0.0
        %721 = vmatpush1.msra.mxu0 0.0
        %722 = vmatprep.subr.mxu0 0.0
        %723 = vmatpush1.msra.mxu0 0.0
        %724 = vmatprep.subr.mxu0 0.0
        %725 = vmatpush1.msra.mxu0 0.0
        %726 = vmatprep.subr.mxu0 0.0
        %727 = vmatpush1.msra.mxu0 0.0
        %728 = vmatprep.subr.mxu0 0.0
        %729 = vmatpush1.msra.mxu0 0.0
        %730 = vmatprep.subr.mxu0 0.0
        %731 = vmatpush1.msra.mxu0 0.0
        %732 = vmatprep.subr.mxu0 0.0
        %733 = vmatpush1.msra.mxu0 0.0
        %734 = vmatprep.subr.mxu0 0.0
        %735 = vmatpush1.msra.mxu0 0.0
        %736 = vmatprep.mubr.f32.mxu0 0.0
        %737 = vmatmul.mubr.f32.gmra.mrb[0].mxu0 %v648
        %v738 = vpop.f32.mrb[0].mxu0
        %v739 = vadd.f32 %v670, %v738
        %v740 = vpop.f32.mrb[0].mxu0
        %741 = vdwg.mxu0
        %742 = vst [vmem:[%s366] sm:$0xff] %v739
        %s743 = sand.u32 %s202, 1
        %s744 = scalar_lea.sflag [#allocation4], %s743
        %s745 = sand.u32 %s202, 1
        %s746 = smul.addr %s745, 8
        %s747 = scalar_lea.vmem [#allocation11], %s746
        // Predicated region
        $region69: #{tpu_custom_call.1} parent=47 // pred_check
          %p748 = pneg %p212
        $region70: #{tpu_custom_call.1} parent=47 // pred_check_branch
          %750 = sbr.rel (%p748) target = $region72
        $region71: #{tpu_custom_call.1} parent=47 // pred_region
          %s752 = ssub.s32 128, 128
          %753 = vsyncadd %s744, %s752
          %s754 = sadd.s32 %s31, %s30
          %s755 = smul.addr %s754, 128
          %s756 = scalar_lea.hbm %s7, %s755
          %s758 = sshll.u32 %s747, 4
          %s759 = int_to_ptr.vmem [resolvable:$true] %s758
          %761 = dma.vmem_to_hbm [thread:$0]  %s759, 128, %s756, %s744
        $region72: #{tpu_custom_call.1} parent=47 // pred_fallthru
          _
      $region48: #{tpu_custom_call.1} parent=5 // pred_fallthru
        _
      %p762 = scmp.le.s32.totalorder 2, %s21
      // Predicated region
      $region73: #{tpu_custom_call.1} parent=5 // pred_check
        %p763 = pneg %p762
      $region74: #{tpu_custom_call.1} parent=5 // pred_check_branch
        %765 = sbr.rel (%p763) target = $region76
      $region75: #{tpu_custom_call.1} parent=5 // pred_region
        %s766 = ssub.s32 %s21, 2
        // Predicated region
        $region77: #{tpu_custom_call.1} parent=75 // pred_check
          %p767 = pneg %p218
        $region78: #{tpu_custom_call.1} parent=75 // pred_check_branch
          %769 = sbr.rel (%p767) target = $region80
        $region79: #{tpu_custom_call.1} parent=75 // pred_region
          %s770 = sand.u32 %s203, 1
          %s771 = scalar_lea.sflag [#allocation4], %s770
          %s772 = sand.u32 %s203, 1
          %s773 = smul.addr %s772, 8
          %s774 = scalar_lea.vmem [#allocation11], %s773
          %775 = dma.done %s771, 128
        $region80: #{tpu_custom_call.1} parent=75 // pred_fallthru
          _
      $region76: #{tpu_custom_call.1} parent=5 // pred_fallthru
        _
    $region6: #{tpu_custom_call.1} parent=1 // loop_footer
      %s25 = sadd.s32 1, %s21
    $region7: #{tpu_custom_call.1} parent=1 // loop_footer_branch
      %20 = sbr.rel target = $region3
    $region8: #{tpu_custom_call.1} parent=1 // loop_exit
      _
    %776 = vsyncpa [#allocation3], 1
    %s777 = scalar_lea.sflag [#allocation3], 1
    %778 = vsyncpa %s777, 1
    %779 = vsyncpa [#allocation6], 1
    %780 = vsyncpa [#allocation9], 1
    %781 = vsyncpa [#allocation4], 1
    %s782 = scalar_lea.sflag [#allocation4], 1
    %783 = vsyncpa %s782, 1

</llo_original>
